<compile_context>
chip_gen: v5e
topology: v5e:2x2
jax: 0.10.0
libtpu: 0.0.40
codegen_flags: <defaults>
</compile_context>

<pallas_src>
import functools
import math

import jax
import jax.numpy as jnp
from jax.experimental import pallas as pl
from jax.experimental.pallas import tpu as pltpu


# ---------------------------------------------------------------------------
# Kernel
# ---------------------------------------------------------------------------
def _fusion_kernel(*refs, n_mod, dims, with_features, with_logits):
    """Fused fusion_projection (+ optional classifier) over one batch tile.

    refs layout:
      [mod_0..mod_{n-1},                      # f32 [tile, d_m]
       w1_0..w1_{n-1},                        # bf16 [d_m, hidden] (row block of W1)
       b1, w2, b2,                            # f32 / bf16 / f32
       (w3, b3, w4, b4 if with_logits),
       out refs: (raw, features if with_features), (logits if with_logits)]
    """
    mods = refs[:n_mod]
    w1s = refs[n_mod:2 * n_mod]
    pos = 2 * n_mod
    b1, w2, b2 = refs[pos], refs[pos + 1], refs[pos + 2]
    pos += 3
    if with_logits:
        w3, b3, w4, b4 = refs[pos], refs[pos + 1], refs[pos + 2], refs[pos + 3]
        pos += 4
    outs = refs[pos:]

    # Layer 1: sum of per-modality dots (f32 accumulation on the MXU).  This
    # avoids a non-128-aligned lane concat feeding the matmul.
    h1 = jnp.dot(mods[0][...].astype(jnp.bfloat16), w1s[0][...],
                 preferred_element_type=jnp.float32)
    for m in range(1, n_mod):
        h1 = h1 + jnp.dot(mods[m][...].astype(jnp.bfloat16), w1s[m][...],
                          preferred_element_type=jnp.float32)
    h1 = jnp.maximum(h1 + b1[...], 0.0)          # ReLU (Dropout = identity)

    # Layer 2.
    h2 = jnp.dot(h1.astype(jnp.bfloat16), w2[...],
                 preferred_element_type=jnp.float32) + b2[...]
    h2 = jnp.maximum(h2, 0.0)

    oi = 0
    if with_features:
        raw_ref, feat_ref = outs[0], outs[1]
        oi = 2
        # raw_features = exact f32 copy of the (conceptually concatenated)
        # inputs, written per-modality into its own lane-dense output.
        off = 0
        for m, d in enumerate(dims):
            raw_ref[:, off:off + d] = mods[m][...].astype(raw_ref.dtype)
            off += d
        feat_ref[...] = h2.astype(feat_ref.dtype)

    if with_logits:
        logit_ref = outs[oi]
        h3 = jnp.dot(h2.astype(jnp.bfloat16), w3[...],
                     preferred_element_type=jnp.float32) + b3[...]
        h3 = jnp.maximum(h3, 0.0)
        logits = jnp.dot(h3.astype(jnp.bfloat16), w4[...],
                         preferred_element_type=jnp.float32) + b4[...]
        logit_ref[...] = logits.astype(logit_ref.dtype)


# ---------------------------------------------------------------------------
# Hardware-aware helpers
# ---------------------------------------------------------------------------
def _vmem_limit_bytes():
    """3/4 of physical VMEM (capped), with a safe fallback if the query fails."""
    try:
        cap = int(pltpu.get_tpu_info().vmem_capacity_bytes)
    except Exception:
        cap = 64 << 20   # conservative: v7x physical VMEM
    return int(min(max(cap * 3 // 4, 32 << 20), 96 << 20))


def _is_megacore():
    """True on chips with >1 TensorCore sharing the grid (v7x-style megacore)."""
    try:
        kind = jax.devices()[0].device_kind.lower()
    except Exception:
        return False
    return ("v7" in kind) or ("v4" in kind)


def _auto_batch_tile(B, max_rows, megacore):
    """Single-TC chips: biggest VMEM-fitting tile (no forced splitting).
    Megacore chips: prefer >=4 grid steps so each core still pipelines."""
    if B <= 8:
        return B
    cap = min(B, 1024, max_rows)
    min_steps = 4 if megacore else 1
    best_any = None
    t = (cap // 8) * 8
    while t >= 8:
        if B % t == 0:
            if best_any is None:
                best_any = t
            if B // t >= min_steps:
                return t
        t -= 8
    return best_any if best_any is not None else B


# ---------------------------------------------------------------------------
# Parameter preparation (one-time; hoists casts out of the forward call)
# ---------------------------------------------------------------------------
def prepare_params(params, input_dims):
    """Split W1 into per-modality row blocks (sorted-key order) and cast all
    weights to bf16 ONCE.  Biases stay f32 ([1, out])."""
    keys = tuple(sorted(input_dims.keys()))
    dims = tuple(int(input_dims[k]) for k in keys)
    prepared = {"keys": keys, "dims": dims}

    w1 = params["w1"]
    off = 0
    w1_slices = []
    for d in dims:
        w1_slices.append(w1[off:off + d, :].astype(jnp.bfloat16))
        off += d
    prepared["w1_slices"] = w1_slices
    prepared["b1"] = params["b1"]
    prepared["w2"] = params["w2"].astype(jnp.bfloat16)
    prepared["b2"] = params["b2"]
    if params.get("w4") is not None:
        prepared["w3"] = params["w3"].astype(jnp.bfloat16)
        prepared["b3"] = params["b3"]
        prepared["w4"] = params["w4"].astype(jnp.bfloat16)
        prepared["b4"] = params["b4"]
    return prepared


# ---------------------------------------------------------------------------
# Forward
# ---------------------------------------------------------------------------
def concat_fusion_forward(features, prepared, *, batch_tile=None,
                          return_features=True, return_logits=False,
                          out_dtype=jnp.float32):
    """JAX/Pallas equivalent of ConcatenationFusion.forward (eval mode).

    features: dict[str, f32[B, dim_m]] (concatenated in sorted-key order)
    prepared: output of prepare_params()
    out_dtype: dtype for 'features'/'logits' (raw_features stays f32 exact).
    """
    keys = prepared["keys"]
    dims = prepared["dims"]
    assert tuple(sorted(features.keys())) == keys, "feature keys mismatch"
    mods = [features[k] for k in keys]
    B = mods[0].shape[0]
    total_dim = sum(dims)
    hidden = prepared["b1"].shape[1]

    has_classifier = "w4" in prepared
    with_logits = bool(return_logits and has_classifier)
    with_features = bool(return_features)
    if not (with_features or with_logits):
        return {}
    num_classes = prepared["b4"].shape[1] if with_logits else 0

    out_itemsize = jnp.dtype(out_dtype).itemsize

    # --- tiling ------------------------------------------------------------
    vmem_limit = _vmem_limit_bytes()
    row_bytes = 4 * total_dim                         # f32 modality inputs
    if with_features:
        row_bytes += 4 * total_dim + out_itemsize * hidden
    if with_logits:
        row_bytes += out_itemsize * num_classes
    budget = vmem_limit // 3                          # headroom for weights + 2x buffering
    max_rows = max(8, budget // (2 * max(row_bytes, 1)))

    if batch_tile is None:
        batch_tile = _auto_batch_tile(B, max_rows, _is_megacore())
    # TODO(synk): pad/mask a ragged final batch tile instead of asserting.
    assert B % batch_tile == 0, "batch must be divisible by batch_tile"
    grid = (B // batch_tile,)

    # --- inputs ------------------------------------------------------------
    w_inputs = list(prepared["w1_slices"]) + [prepared["b1"],
                                              prepared["w2"], prepared["b2"]]
    if with_logits:
        w_inputs += [prepared["w3"], prepared["b3"],
                     prepared["w4"], prepared["b4"]]

    # Weights/biases use a constant index_map (same block every step), so the
    # pipeline does not re-DMA them across grid iterations.
    def rep(shape):
        return pl.BlockSpec(shape, lambda i: (0, 0))

    in_specs = [pl.BlockSpec((batch_tile, d), lambda i: (i, 0)) for d in dims]
    in_specs += [rep(tuple(w.shape)) for w in w_inputs]

    # --- outputs (one per requested tensor; no packed slab) -----------------
    out_names, out_shapes, out_specs = [], [], []
    if with_features:
        out_names += ["raw_features", "features"]
        out_shapes += [jax.ShapeDtypeStruct((B, total_dim), jnp.float32),
                       jax.ShapeDtypeStruct((B, hidden), out_dtype)]
        out_specs += [pl.BlockSpec((batch_tile, total_dim), lambda i: (i, 0)),
                      pl.BlockSpec((batch_tile, hidden), lambda i: (i, 0))]
    if with_logits:
        out_names += ["logits"]
        out_shapes += [jax.ShapeDtypeStruct((B, num_classes), out_dtype)]
        out_specs += [pl.BlockSpec((batch_tile, num_classes), lambda i: (i, 0))]

    kernel = functools.partial(_fusion_kernel,
                               n_mod=len(mods),
                               dims=dims,
                               with_features=with_features,
                               with_logits=with_logits)

    outs = pl.pallas_call(
        kernel,
        out_shape=tuple(out_shapes),
        grid_spec=pltpu.PrefetchScalarGridSpec(
            num_scalar_prefetch=0,
            grid=grid,
            in_specs=in_specs,
            out_specs=tuple(out_specs),
        ),
        compiler_params=pltpu.CompilerParams(
            dimension_semantics=("parallel",),
            vmem_limit_bytes=vmem_limit,
        ),
    )(*mods, *w_inputs)

    return dict(zip(out_names, outs))


# ---------------------------------------------------------------------------
# Init + pure-JAX reference
# ---------------------------------------------------------------------------
def _init_linear(key, fan_in, fan_out):
    """~ PyTorch Linear default init; weight already [fan_in, fan_out], bias [1, out]."""
    kw, kb = jax.random.split(key)
    bound = 1.0 / math.sqrt(fan_in)
    w = jax.random.uniform(kw, (fan_in, fan_out), jnp.float32, -bound, bound)
    b = jax.random.uniform(kb, (1, fan_out), jnp.float32, -bound, bound)
    return w, b


def _reference_forward(features, params, with_logits=True):
    """Pure-JAX reference mirroring the bf16-operand / f32-accumulate math."""
    keys = sorted(features.keys())
    x = jnp.concatenate([features[k] for k in keys], axis=1)

    def lin(h, w, b):
        return jnp.dot(h.astype(jnp.bfloat16), w.astype(jnp.bfloat16),
                       preferred_element_type=jnp.float32) + b

    h = jnp.maximum(lin(x, params["w1"], params["b1"]), 0.0)
    h = jnp.maximum(lin(h, params["w2"], params["b2"]), 0.0)
    logits = None
    if with_logits:
        c = jnp.maximum(lin(h, params["w3"], params["b3"]), 0.0)
        logits = lin(c, params["w4"], params["b4"])
    return x, h, logits


if __name__ == "__main__":
    # Small deterministic problem:
    #   input_dims = {'audio': 32, 'text': 48, 'vision': 48} -> total_dim = 128
    #   hidden_size = 64, num_classes = 16, batch = 64
    input_dims = {"audio": 32, "text": 48, "vision": 48}
    hidden_size = 64
    num_classes = 16
    batch = 64

    total_dim = sum(input_dims.values())

    root = jax.random.PRNGKey(0)
    k_feat, k_p1, k_p2, k_p3, k_p4 = jax.random.split(root, 5)

    feat_keys = jax.random.split(k_feat, len(input_dims))
    features = {
        name: jax.random.normal(k, (batch, dim), jnp.float32)
        for k, (name, dim) in zip(feat_keys, sorted(input_dims.items()))
    }

    w1, b1 = _init_linear(k_p1, total_dim, hidden_size)
    w2, b2 = _init_linear(k_p2, hidden_size, hidden_size)
    w3, b3 = _init_linear(k_p3, hidden_size, hidden_size // 2)
    w4, b4 = _init_linear(k_p4, hidden_size // 2, num_classes)
    params = dict(w1=w1, b1=b1, w2=w2, b2=b2, w3=w3, b3=b3, w4=w4, b4=b4)

    prepared = prepare_params(params, input_dims)   # one-time bf16 cast + W1 split

    x_ref, feat_ref, logits_ref = _reference_forward(features, params, True)

    # Full path: features + logits.
    out = concat_fusion_forward(features, prepared,
                                return_features=True, return_logits=True)
    jax.block_until_ready(out)
    assert out["raw_features"].shape == (batch, total_dim)
    assert out["features"].shape == (batch, hidden_size)
    assert out["logits"].shape == (batch, num_classes)
    assert jnp.allclose(out["raw_features"], x_ref, atol=1e-6)
    assert jnp.allclose(out["features"], feat_ref, atol=1e-2, rtol=1e-2)
    assert jnp.allclose(out["logits"], logits_ref, atol=1e-2, rtol=1e-2)

    # Features-only path (classifier chain skipped at trace time).
    out_f = concat_fusion_forward(features, prepared,
                                  return_features=True, return_logits=False)
    jax.block_until_ready(out_f)
    assert "logits" not in out_f
    assert jnp.allclose(out_f["raw_features"], x_ref, atol=1e-6)
    assert jnp.allclose(out_f["features"], feat_ref, atol=1e-2, rtol=1e-2)

    # Logits-only path (no raw_features/features writeback at all).
    out_l = concat_fusion_forward(features, prepared,
                                  return_features=False, return_logits=True)
    jax.block_until_ready(out_l)
    assert set(out_l.keys()) == {"logits"}
    assert jnp.allclose(out_l["logits"], logits_ref, atol=1e-2, rtol=1e-2)

    print("KERNEL_OK")
</pallas_src>

<mosaic_0001>
module attributes {stable_mosaic.version = 11 : i64} {
  func.func @_fusion_kernel(%arg0: i32, %arg1: memref<64x32xf32, #tpu.memory_space<vmem>>, %arg2: memref<64x48xf32, #tpu.memory_space<vmem>>, %arg3: memref<64x48xf32, #tpu.memory_space<vmem>>, %arg4: memref<32x64xbf16, #tpu.memory_space<vmem>>, %arg5: memref<48x64xbf16, #tpu.memory_space<vmem>>, %arg6: memref<48x64xbf16, #tpu.memory_space<vmem>>, %arg7: memref<1x64xf32, #tpu.memory_space<vmem>>, %arg8: memref<64x64xbf16, #tpu.memory_space<vmem>>, %arg9: memref<1x64xf32, #tpu.memory_space<vmem>>, %arg10: memref<64x32xbf16, #tpu.memory_space<vmem>>, %arg11: memref<1x32xf32, #tpu.memory_space<vmem>>, %arg12: memref<32x16xbf16, #tpu.memory_space<vmem>>, %arg13: memref<1x16xf32, #tpu.memory_space<vmem>>, %arg14: memref<64x128xf32, #tpu.memory_space<vmem>>, %arg15: memref<64x64xf32, #tpu.memory_space<vmem>>, %arg16: memref<64x16xf32, #tpu.memory_space<vmem>>) attributes {dimension_semantics = [#tpu.dimension_semantics<parallel>], iteration_bounds = array<i64: 1>, scalar_prefetch = 0 : i64, scratch_operands = 0 : i64, tpu.core_type = #tpu.core_type<tc>, window_params = [{transform_indices = @transform_0, window_bounds = array<i64: 64, 32>}, {transform_indices = @transform_1, window_bounds = array<i64: 64, 48>}, {transform_indices = @transform_2, window_bounds = array<i64: 64, 48>}, {pipeline_mode = #tpu.pipeline_mode<synchronous>, transform_indices = @transform_3, window_bounds = array<i64: 32, 64>}, {pipeline_mode = #tpu.pipeline_mode<synchronous>, transform_indices = @transform_4, window_bounds = array<i64: 48, 64>}, {pipeline_mode = #tpu.pipeline_mode<synchronous>, transform_indices = @transform_5, window_bounds = array<i64: 48, 64>}, {pipeline_mode = #tpu.pipeline_mode<synchronous>, transform_indices = @transform_6, window_bounds = array<i64: 1, 64>}, {pipeline_mode = #tpu.pipeline_mode<synchronous>, transform_indices = @transform_7, window_bounds = array<i64: 64, 64>}, {pipeline_mode = #tpu.pipeline_mode<synchronous>, transform_indices = @transform_8, window_bounds = array<i64: 1, 64>}, {pipeline_mode = #tpu.pipeline_mode<synchronous>, transform_indices = @transform_9, window_bounds = array<i64: 64, 32>}, {pipeline_mode = #tpu.pipeline_mode<synchronous>, transform_indices = @transform_10, window_bounds = array<i64: 1, 32>}, {pipeline_mode = #tpu.pipeline_mode<synchronous>, transform_indices = @transform_11, window_bounds = array<i64: 32, 16>}, {pipeline_mode = #tpu.pipeline_mode<synchronous>, transform_indices = @transform_12, window_bounds = array<i64: 1, 16>}, {transform_indices = @transform_13, window_bounds = array<i64: 64, 128>}, {transform_indices = @transform_14, window_bounds = array<i64: 64, 64>}, {transform_indices = @transform_15, window_bounds = array<i64: 64, 16>}]} {
    %c0 = arith.constant 0 : index
    %c0_0 = arith.constant 0 : index
    %0 = vector.load %arg1[%c0, %c0_0] : memref<64x32xf32, #tpu.memory_space<vmem>>, vector<64x32xf32>
    %1 = arith.truncf %0 : vector<64x32xf32> to vector<64x32xbf16>
    %c0_1 = arith.constant 0 : index
    %c0_2 = arith.constant 0 : index
    %2 = vector.load %arg4[%c0_1, %c0_2] : memref<32x64xbf16, #tpu.memory_space<vmem>>, vector<32x64xbf16>
    %cst = arith.constant dense<0.000000e+00> : vector<64x64xf32>
    %3 = tpu.matmul %1, %2, %cst {dimension_numbers = #tpu.dot_dimension_numbers<[1], [0], [0], [1], [0, 0, 1, 1], [], []>} : vector<64x32xbf16>, vector<32x64xbf16>, vector<64x64xf32> -> vector<64x64xf32>
    %c0_3 = arith.constant 0 : index
    %c0_4 = arith.constant 0 : index
    %4 = vector.load %arg2[%c0_3, %c0_4] : memref<64x48xf32, #tpu.memory_space<vmem>>, vector<64x48xf32>
    %5 = arith.truncf %4 : vector<64x48xf32> to vector<64x48xbf16>
    %c0_5 = arith.constant 0 : index
    %c0_6 = arith.constant 0 : index
    %6 = vector.load %arg5[%c0_5, %c0_6] : memref<48x64xbf16, #tpu.memory_space<vmem>>, vector<48x64xbf16>
    %cst_7 = arith.constant dense<0.000000e+00> : vector<64x64xf32>
    %7 = tpu.matmul %5, %6, %cst_7 {dimension_numbers = #tpu.dot_dimension_numbers<[1], [0], [0], [1], [0, 0, 1, 1], [], []>} : vector<64x48xbf16>, vector<48x64xbf16>, vector<64x64xf32> -> vector<64x64xf32>
    %8 = arith.addf %3, %7 : vector<64x64xf32>
    %c0_8 = arith.constant 0 : index
    %c0_9 = arith.constant 0 : index
    %9 = vector.load %arg3[%c0_8, %c0_9] : memref<64x48xf32, #tpu.memory_space<vmem>>, vector<64x48xf32>
    %10 = arith.truncf %9 : vector<64x48xf32> to vector<64x48xbf16>
    %c0_10 = arith.constant 0 : index
    %c0_11 = arith.constant 0 : index
    %11 = vector.load %arg6[%c0_10, %c0_11] : memref<48x64xbf16, #tpu.memory_space<vmem>>, vector<48x64xbf16>
    %cst_12 = arith.constant dense<0.000000e+00> : vector<64x64xf32>
    %12 = tpu.matmul %10, %11, %cst_12 {dimension_numbers = #tpu.dot_dimension_numbers<[1], [0], [0], [1], [0, 0, 1, 1], [], []>} : vector<64x48xbf16>, vector<48x64xbf16>, vector<64x64xf32> -> vector<64x64xf32>
    %13 = arith.addf %8, %12 : vector<64x64xf32>
    %c0_13 = arith.constant 0 : index
    %c0_14 = arith.constant 0 : index
    %14 = vector.load %arg7[%c0_13, %c0_14] : memref<1x64xf32, #tpu.memory_space<vmem>>, vector<1x64xf32>
    %15 = vector.broadcast %14 : vector<1x64xf32> to vector<64x64xf32>
    %16 = arith.addf %13, %15 : vector<64x64xf32>
    %cst_15 = arith.constant 0.000000e+00 : f32
    %17 = vector.broadcast %cst_15 : f32 to vector<64x64xf32>
    %18 = arith.maximumf %16, %17 : vector<64x64xf32>
    %19 = arith.truncf %18 : vector<64x64xf32> to vector<64x64xbf16>
    %c0_16 = arith.constant 0 : index
    %c0_17 = arith.constant 0 : index
    %20 = vector.load %arg8[%c0_16, %c0_17] : memref<64x64xbf16, #tpu.memory_space<vmem>>, vector<64x64xbf16>
    %cst_18 = arith.constant dense<0.000000e+00> : vector<64x64xf32>
    %21 = tpu.matmul %19, %20, %cst_18 {dimension_numbers = #tpu.dot_dimension_numbers<[1], [0], [0], [1], [0, 0, 1, 1], [], []>} : vector<64x64xbf16>, vector<64x64xbf16>, vector<64x64xf32> -> vector<64x64xf32>
    %c0_19 = arith.constant 0 : index
    %c0_20 = arith.constant 0 : index
    %22 = vector.load %arg9[%c0_19, %c0_20] : memref<1x64xf32, #tpu.memory_space<vmem>>, vector<1x64xf32>
    %23 = vector.broadcast %22 : vector<1x64xf32> to vector<64x64xf32>
    %24 = arith.addf %21, %23 : vector<64x64xf32>
    %cst_21 = arith.constant 0.000000e+00 : f32
    %25 = vector.broadcast %cst_21 : f32 to vector<64x64xf32>
    %26 = arith.maximumf %24, %25 : vector<64x64xf32>
    %c0_22 = arith.constant 0 : index
    %c0_23 = arith.constant 0 : index
    %27 = vector.load %arg1[%c0_22, %c0_23] : memref<64x32xf32, #tpu.memory_space<vmem>>, vector<64x32xf32>
    %c0_24 = arith.constant 0 : index
    %c0_25 = arith.constant 0 : index
    %28 = vector.load %arg14[%c0_24, %c0_25] : memref<64x128xf32, #tpu.memory_space<vmem>>, vector<64x32xf32>
    tpu.vector_store %arg14[%c0_24, %c0_25], %27 {strides = array<i32>} : memref<64x128xf32, #tpu.memory_space<vmem>>, vector<64x32xf32>,
    %c0_26 = arith.constant 0 : index
    %c0_27 = arith.constant 0 : index
    %29 = vector.load %arg2[%c0_26, %c0_27] : memref<64x48xf32, #tpu.memory_space<vmem>>, vector<64x48xf32>
    %c0_28 = arith.constant 0 : index
    %c32 = arith.constant 32 : index
    %30 = vector.load %arg14[%c0_28, %c32] : memref<64x128xf32, #tpu.memory_space<vmem>>, vector<64x48xf32>
    tpu.vector_store %arg14[%c0_28, %c32], %29 {strides = array<i32>} : memref<64x128xf32, #tpu.memory_space<vmem>>, vector<64x48xf32>,
    %c0_29 = arith.constant 0 : index
    %c0_30 = arith.constant 0 : index
    %31 = vector.load %arg3[%c0_29, %c0_30] : memref<64x48xf32, #tpu.memory_space<vmem>>, vector<64x48xf32>
    %c0_31 = arith.constant 0 : index
    %c80 = arith.constant 80 : index
    %32 = vector.load %arg14[%c0_31, %c80] : memref<64x128xf32, #tpu.memory_space<vmem>>, vector<64x48xf32>
    tpu.vector_store %arg14[%c0_31, %c80], %31 {strides = array<i32>} : memref<64x128xf32, #tpu.memory_space<vmem>>, vector<64x48xf32>,
    %c0_32 = arith.constant 0 : index
    %c0_33 = arith.constant 0 : index
    %33 = vector.load %arg15[%c0_32, %c0_33] : memref<64x64xf32, #tpu.memory_space<vmem>>, vector<64x64xf32>
    tpu.vector_store %arg15[%c0_32, %c0_33], %26 {strides = array<i32>} : memref<64x64xf32, #tpu.memory_space<vmem>>, vector<64x64xf32>,
    %34 = arith.truncf %26 : vector<64x64xf32> to vector<64x64xbf16>
    %c0_34 = arith.constant 0 : index
    %c0_35 = arith.constant 0 : index
    %35 = vector.load %arg10[%c0_34, %c0_35] : memref<64x32xbf16, #tpu.memory_space<vmem>>, vector<64x32xbf16>
    %cst_36 = arith.constant dense<0.000000e+00> : vector<64x32xf32>
    %36 = tpu.matmul %34, %35, %cst_36 {dimension_numbers = #tpu.dot_dimension_numbers<[1], [0], [0], [1], [0, 0, 1, 1], [], []>} : vector<64x64xbf16>, vector<64x32xbf16>, vector<64x32xf32> -> vector<64x32xf32>
    %c0_37 = arith.constant 0 : index
    %c0_38 = arith.constant 0 : index
    %37 = vector.load %arg11[%c0_37, %c0_38] : memref<1x32xf32, #tpu.memory_space<vmem>>, vector<1x32xf32>
    %38 = vector.broadcast %37 : vector<1x32xf32> to vector<64x32xf32>
    %39 = arith.addf %36, %38 : vector<64x32xf32>
    %cst_39 = arith.constant 0.000000e+00 : f32
    %40 = vector.broadcast %cst_39 : f32 to vector<64x32xf32>
    %41 = arith.maximumf %39, %40 : vector<64x32xf32>
    %42 = arith.truncf %41 : vector<64x32xf32> to vector<64x32xbf16>
    %c0_40 = arith.constant 0 : index
    %c0_41 = arith.constant 0 : index
    %43 = vector.load %arg12[%c0_40, %c0_41] : memref<32x16xbf16, #tpu.memory_space<vmem>>, vector<32x16xbf16>
    %cst_42 = arith.constant dense<0.000000e+00> : vector<64x16xf32>
    %44 = tpu.matmul %42, %43, %cst_42 {dimension_numbers = #tpu.dot_dimension_numbers<[1], [0], [0], [1], [0, 0, 1, 1], [], []>} : vector<64x32xbf16>, vector<32x16xbf16>, vector<64x16xf32> -> vector<64x16xf32>
    %c0_43 = arith.constant 0 : index
    %c0_44 = arith.constant 0 : index
    %45 = vector.load %arg13[%c0_43, %c0_44] : memref<1x16xf32, #tpu.memory_space<vmem>>, vector<1x16xf32>
    %46 = vector.broadcast %45 : vector<1x16xf32> to vector<64x16xf32>
    %47 = arith.addf %44, %46 : vector<64x16xf32>
    %c0_45 = arith.constant 0 : index
    %c0_46 = arith.constant 0 : index
    %48 = vector.load %arg16[%c0_45, %c0_46] : memref<64x16xf32, #tpu.memory_space<vmem>>, vector<64x16xf32>
    tpu.vector_store %arg16[%c0_45, %c0_46], %47 {strides = array<i32>} : memref<64x16xf32, #tpu.memory_space<vmem>>, vector<64x16xf32>,
    return
  }
  func.func @transform_0(%arg0: i32) -> (i32, i32) {
    %c0_i32 = arith.constant 0 : i32
    %c0_i32_0 = arith.constant 0 : i32
    return %arg0, %c0_i32 : i32, i32
  }
  func.func @transform_1(%arg0: i32) -> (i32, i32) {
    %c0_i32 = arith.constant 0 : i32
    %c0_i32_0 = arith.constant 0 : i32
    return %arg0, %c0_i32 : i32, i32
  }
  func.func @transform_2(%arg0: i32) -> (i32, i32) {
    %c0_i32 = arith.constant 0 : i32
    %c0_i32_0 = arith.constant 0 : i32
    return %arg0, %c0_i32 : i32, i32
  }
  func.func @transform_3(%arg0: i32) -> (i32, i32) {
    %c0_i32 = arith.constant 0 : i32
    %c0_i32_0 = arith.constant 0 : i32
    %c0_i32_1 = arith.constant 0 : i32
    return %c0_i32, %c0_i32_0 : i32, i32
  }
  func.func @transform_4(%arg0: i32) -> (i32, i32) {
    %c0_i32 = arith.constant 0 : i32
    %c0_i32_0 = arith.constant 0 : i32
    %c0_i32_1 = arith.constant 0 : i32
    return %c0_i32, %c0_i32_0 : i32, i32
  }
  func.func @transform_5(%arg0: i32) -> (i32, i32) {
    %c0_i32 = arith.constant 0 : i32
    %c0_i32_0 = arith.constant 0 : i32
    %c0_i32_1 = arith.constant 0 : i32
    return %c0_i32, %c0_i32_0 : i32, i32
  }
  func.func @transform_6(%arg0: i32) -> (i32, i32) {
    %c0_i32 = arith.constant 0 : i32
    %c0_i32_0 = arith.constant 0 : i32
    %c0_i32_1 = arith.constant 0 : i32
    return %c0_i32, %c0_i32_0 : i32, i32
  }
  func.func @transform_7(%arg0: i32) -> (i32, i32) {
    %c0_i32 = arith.constant 0 : i32
    %c0_i32_0 = arith.constant 0 : i32
    %c0_i32_1 = arith.constant 0 : i32
    return %c0_i32, %c0_i32_0 : i32, i32
  }
  func.func @transform_8(%arg0: i32) -> (i32, i32) {
    %c0_i32 = arith.constant 0 : i32
    %c0_i32_0 = arith.constant 0 : i32
    %c0_i32_1 = arith.constant 0 : i32
    return %c0_i32, %c0_i32_0 : i32, i32
  }
  func.func @transform_9(%arg0: i32) -> (i32, i32) {
    %c0_i32 = arith.constant 0 : i32
    %c0_i32_0 = arith.constant 0 : i32
    %c0_i32_1 = arith.constant 0 : i32
    return %c0_i32, %c0_i32_0 : i32, i32
  }
  func.func @transform_10(%arg0: i32) -> (i32, i32) {
    %c0_i32 = arith.constant 0 : i32
    %c0_i32_0 = arith.constant 0 : i32
    %c0_i32_1 = arith.constant 0 : i32
    return %c0_i32, %c0_i32_0 : i32, i32
  }
  func.func @transform_11(%arg0: i32) -> (i32, i32) {
    %c0_i32 = arith.constant 0 : i32
    %c0_i32_0 = arith.constant 0 : i32
    %c0_i32_1 = arith.constant 0 : i32
    return %c0_i32, %c0_i32_0 : i32, i32
  }
  func.func @transform_12(%arg0: i32) -> (i32, i32) {
    %c0_i32 = arith.constant 0 : i32
    %c0_i32_0 = arith.constant 0 : i32
    %c0_i32_1 = arith.constant 0 : i32
    return %c0_i32, %c0_i32_0 : i32, i32
  }
  func.func @transform_13(%arg0: i32) -> (i32, i32) {
    %c0_i32 = arith.constant 0 : i32
    %c0_i32_0 = arith.constant 0 : i32
    return %arg0, %c0_i32 : i32, i32
  }
  func.func @transform_14(%arg0: i32) -> (i32, i32) {
    %c0_i32 = arith.constant 0 : i32
    %c0_i32_0 = arith.constant 0 : i32
    return %arg0, %c0_i32 : i32, i32
  }
  func.func @transform_15(%arg0: i32) -> (i32, i32) {
    %c0_i32 = arith.constant 0 : i32
    %c0_i32_0 = arith.constant 0 : i32
    return %arg0, %c0_i32 : i32, i32
  }
}

</mosaic_0001>

<llo_original>
// kernel: tpu_custom_call.1
$region0: #{tpu_custom_call.1}
  #allocation0 [shape = 'u32[]', space=smem, size = 0x4, offset = 0x4, fixed_abs, tag = 'smem constant byte address 0x4 - core index']
  #allocation1 [shape = 'u32[72,128]{1,0:T(1,128)}', space=vmem, size = 0x9000, scoped, tag = 'internal scratch']
  %s0 = inlined_call_operand.vmem [shape: f32[64,32], index: 0, kind: input, shape index: {}]
  %s1 = inlined_call_operand.vmem [shape: f32[64,48], index: 1, kind: input, shape index: {}]
  %s2 = inlined_call_operand.vmem [shape: f32[64,48], index: 2, kind: input, shape index: {}]
  %s3 = inlined_call_operand.vmem [shape: bf16[32,64], index: 3, kind: input, shape index: {}]
  %s4 = inlined_call_operand.vmem [shape: bf16[48,64], index: 4, kind: input, shape index: {}]
  %s5 = inlined_call_operand.vmem [shape: bf16[48,64], index: 5, kind: input, shape index: {}]
  %s6 = inlined_call_operand.vmem [shape: f32[1,64], index: 6, kind: input, shape index: {}]
  %s7 = inlined_call_operand.vmem [shape: bf16[64,64], index: 7, kind: input, shape index: {}]
  %s8 = inlined_call_operand.vmem [shape: f32[1,64], index: 8, kind: input, shape index: {}]
  %s9 = inlined_call_operand.vmem [shape: bf16[64,32], index: 9, kind: input, shape index: {}]
  %s10 = inlined_call_operand.vmem [shape: f32[1,32], index: 10, kind: input, shape index: {}]
  %s11 = inlined_call_operand.vmem [shape: bf16[32,16], index: 11, kind: input, shape index: {}]
  %s12 = inlined_call_operand.vmem [shape: f32[1,16], index: 12, kind: input, shape index: {}]
  %s13 = inlined_call_operand.hbm [shape: f32[64,128], index: 13, kind: output, shape index: {0}]
  %s14 = inlined_call_operand.hbm [shape: f32[64,64], index: 14, kind: output, shape index: {1}]
  %s15 = inlined_call_operand.vmem [shape: f32[64,16], index: 15, kind: output, shape index: {2}]
  %16 = xla_tuple %s13, %s14, %s15
  %s17 = sld [smem:[#allocation0]]
  $region78: #{tpu_custom_call.1} parent=0
    _
  %s19 = ssub.s32 1, %s17
  %s20 = scalar_select 0, %s19, %s17
  $region1: #{tpu_custom_call.1} parent=0
    #allocation2 [shape = 'u8[32768]{0}', space=vmem, size = 0x8000, scoped, tag = 'output window, operand 0, single buffered']
    #allocation3 [shape = 's32[1]{0}', space=sflag, size = 0x4, scoped, tag = 'scoped memory for tpu_custom_call.1']
    #allocation4 [shape = 'u8[32768]{0}', space=vmem, size = 0x8000, scoped, tag = 'output window, operand 1, single buffered']
    #allocation5 [shape = 's32[1]{0}', space=sflag, size = 0x4, scoped, tag = 'scoped memory for tpu_custom_call.1']
    %21 = vsyncpa [#allocation3], 0
    %22 = vsyncpa [#allocation5], 0
    // Predicated region
    $region2: #{tpu_custom_call.1} parent=1 // pred_check
      _
    $region3: #{tpu_custom_call.1} parent=1 // pred_check_branch
      %24 = sbr.rel (0) target = $region5
    $region4: #{tpu_custom_call.1} parent=1 // pred_region
      _
    $region5: #{tpu_custom_call.1} parent=1 // pred_fallthru
      _
    // Predicated region
    $region6: #{tpu_custom_call.1} parent=1 // pred_check
      _
    $region7: #{tpu_custom_call.1} parent=1 // pred_check_branch
      %26 = sbr.rel (0) target = $region9
    $region8: #{tpu_custom_call.1} parent=1 // pred_region
      _
    $region9: #{tpu_custom_call.1} parent=1 // pred_fallthru
      _
    // Predicated region
    $region10: #{tpu_custom_call.1} parent=1 // pred_check
      _
    $region11: #{tpu_custom_call.1} parent=1 // pred_check_branch
      %28 = sbr.rel (0) target = $region13
    $region12: #{tpu_custom_call.1} parent=1 // pred_region
      _
    $region13: #{tpu_custom_call.1} parent=1 // pred_fallthru
      _
    // Predicated region
    $region14: #{tpu_custom_call.1} parent=1 // pred_check
      _
    $region15: #{tpu_custom_call.1} parent=1 // pred_check_branch
      %30 = sbr.rel (0) target = $region17
    $region16: #{tpu_custom_call.1} parent=1 // pred_region
      _
    $region17: #{tpu_custom_call.1} parent=1 // pred_fallthru
      _
    // Predicated region
    $region18: #{tpu_custom_call.1} parent=1 // pred_check
      _
    $region19: #{tpu_custom_call.1} parent=1 // pred_check_branch
      %32 = sbr.rel (0) target = $region21
    $region20: #{tpu_custom_call.1} parent=1 // pred_region
      _
    $region21: #{tpu_custom_call.1} parent=1 // pred_fallthru
      _
    // Predicated region
    $region22: #{tpu_custom_call.1} parent=1 // pred_check
      _
    $region23: #{tpu_custom_call.1} parent=1 // pred_check_branch
      %34 = sbr.rel (0) target = $region25
    $region24: #{tpu_custom_call.1} parent=1 // pred_region
      _
    $region25: #{tpu_custom_call.1} parent=1 // pred_fallthru
      _
    // Predicated region
    $region26: #{tpu_custom_call.1} parent=1 // pred_check
      _
    $region27: #{tpu_custom_call.1} parent=1 // pred_check_branch
      %36 = sbr.rel (0) target = $region29
    $region28: #{tpu_custom_call.1} parent=1 // pred_region
      _
    $region29: #{tpu_custom_call.1} parent=1 // pred_fallthru
      _
    // Predicated region
    $region30: #{tpu_custom_call.1} parent=1 // pred_check
      _
    $region31: #{tpu_custom_call.1} parent=1 // pred_check_branch
      %38 = sbr.rel (0) target = $region33
    $region32: #{tpu_custom_call.1} parent=1 // pred_region
      _
    $region33: #{tpu_custom_call.1} parent=1 // pred_fallthru
      _
    // Predicated region
    $region34: #{tpu_custom_call.1} parent=1 // pred_check
      _
    $region35: #{tpu_custom_call.1} parent=1 // pred_check_branch
      %40 = sbr.rel (0) target = $region37
    $region36: #{tpu_custom_call.1} parent=1 // pred_region
      _
    $region37: #{tpu_custom_call.1} parent=1 // pred_fallthru
      _
    // Predicated region
    $region38: #{tpu_custom_call.1} parent=1 // pred_check
      _
    $region39: #{tpu_custom_call.1} parent=1 // pred_check_branch
      %42 = sbr.rel (0) target = $region41
    $region40: #{tpu_custom_call.1} parent=1 // pred_region
      _
    $region41: #{tpu_custom_call.1} parent=1 // pred_fallthru
      _
    // Predicated region
    $region42: #{tpu_custom_call.1} parent=1 // pred_check
      _
    $region43: #{tpu_custom_call.1} parent=1 // pred_check_branch
      %44 = sbr.rel (0) target = $region45
    $region44: #{tpu_custom_call.1} parent=1 // pred_region
      _
    $region45: #{tpu_custom_call.1} parent=1 // pred_fallthru
      _
    // Predicated region
    $region46: #{tpu_custom_call.1} parent=1 // pred_check
      _
    $region47: #{tpu_custom_call.1} parent=1 // pred_check_branch
      %46 = sbr.rel (0) target = $region49
    $region48: #{tpu_custom_call.1} parent=1 // pred_region
      _
    $region49: #{tpu_custom_call.1} parent=1 // pred_fallthru
      _
    // Predicated region
    $region50: #{tpu_custom_call.1} parent=1 // pred_check
      _
    $region51: #{tpu_custom_call.1} parent=1 // pred_check_branch
      %48 = sbr.rel (0) target = $region53
    $region52: #{tpu_custom_call.1} parent=1 // pred_region
      _
    $region53: #{tpu_custom_call.1} parent=1 // pred_fallthru
      _
    %v50 = vld [vmem:[%s0] sm:$0xff]
    %v51 = vld [vmem:[%s0 + $0x8] sm:$0xff]
    %v52 = vld [vmem:[%s0 + $0x10] sm:$0xff]
    %v53 = vld [vmem:[%s0 + $0x18] sm:$0xff]
    %v54 = vld [vmem:[%s0 + $0x20] sm:$0xff]
    %v55 = vld [vmem:[%s0 + $0x28] sm:$0xff]
    %v56 = vld [vmem:[%s0 + $0x30] sm:$0xff]
    %v57 = vld [vmem:[%s0 + $0x38] sm:$0xff]
    %v58 = vpack.c.bf16 %v51, %v50
    %v59 = vpack.c.bf16 %v53, %v52
    %v60 = vpack.c.bf16 %v55, %v54
    %v61 = vpack.c.bf16 %v57, %v56
    %v62 = vld [vmem:[%s3] sm:$0xf]
    %v63 = vld [vmem:[%s3 + $0x4] sm:$0xf]
    %v64 = vld [vmem:[%s3 + $0x8] sm:$0xf]
    %v65 = vld [vmem:[%s3 + $0xc] sm:$0xf]
    %v66 = vld [vmem:[%s1] sm:$0xff]
    %v67 = vld [vmem:[%s1 + $0x8] sm:$0xff]
    %v68 = vld [vmem:[%s1 + $0x10] sm:$0xff]
    %v69 = vld [vmem:[%s1 + $0x18] sm:$0xff]
    %v70 = vld [vmem:[%s1 + $0x20] sm:$0xff]
    %v71 = vld [vmem:[%s1 + $0x28] sm:$0xff]
    %v72 = vld [vmem:[%s1 + $0x30] sm:$0xff]
    %v73 = vld [vmem:[%s1 + $0x38] sm:$0xff]
    %v74 = vpack.c.bf16 %v67, %v66
    %v75 = vpack.c.bf16 %v69, %v68
    %v76 = vpack.c.bf16 %v71, %v70
    %v77 = vpack.c.bf16 %v73, %v72
    %v78 = vld [vmem:[%s4] sm:$0xf]
    %v79 = vld [vmem:[%s4 + $0x4] sm:$0xf]
    %v80 = vld [vmem:[%s4 + $0x8] sm:$0xf]
    %v81 = vld [vmem:[%s4 + $0xc] sm:$0xf]
    %v82 = vld [vmem:[%s4 + $0x10] sm:$0xf]
    %v83 = vld [vmem:[%s4 + $0x14] sm:$0xf]
    %v90 = vunpack.c.l.b16 %v78
    %v91 = vunpack.c.l.b16 %v79
    %v92 = vunpack.c.l.b16 %v80
    %v93 = vunpack.c.l.b16 %v81
    %v94 = vunpack.c.l.b16 %v82
    %v95 = vunpack.c.l.b16 %v83
    %v96 = vpack.c.b16 %v91, %v90
    %v97 = vpack.c.b16 %v93, %v92
    %v98 = vpack.c.b16 %v95, %v94
    %vm102 = vcmask 392192
    %v104 = vsel %vm102, %v74, 0
    %v107 = vsel %vm102, %v75, 0
    %v110 = vsel %vm102, %v76, 0
    %v113 = vsel %vm102, %v77, 0
    %115 = vmatpush.bf16.msra.mxu0 0
    %116 = vmatpush.bf16.msra.mxu0 0
    %117 = vmatpush.bf16.msra.mxu0 0
    %118 = vmatpush.bf16.msra.mxu0 0
    %119 = vmatpush.bf16.msra.mxu0 0
    %120 = vmatpush.bf16.msra.mxu0 %v98
    %121 = vmatpush.bf16.msra.mxu0 %v97
    %122 = vmatpush.bf16.msra.mxu0 %v96
    %123 = vmatmul.bf16.gmra.mxu0 %v104
    %v124 = vpop.f32.mrf.mxu0
    %v125 = vadd.f32 0.0, %v124
    %v126 = vpop.f32.mrf.mxu0
    %v127 = vadd.f32 0.0, %v126
    %128 = vmatmul.bf16.gmra.mxu0 %v107
    %v129 = vpop.f32.mrf.mxu0
    %v130 = vadd.f32 0.0, %v129
    %v131 = vpop.f32.mrf.mxu0
    %v132 = vadd.f32 0.0, %v131
    %133 = vmatmul.bf16.gmra.mxu0 %v110
    %v134 = vpop.f32.mrf.mxu0
    %v135 = vadd.f32 0.0, %v134
    %v136 = vpop.f32.mrf.mxu0
    %v137 = vadd.f32 0.0, %v136
    %138 = vmatmul.bf16.gmra.mxu0 %v113
    %v139 = vpop.f32.mrf.mxu0
    %v140 = vadd.f32 0.0, %v139
    %v141 = vpop.f32.mrf.mxu0
    %v142 = vadd.f32 0.0, %v141
    %143 = vdwg.mxu0
    %v148 = vunpack.c.l.b16 %v62
    %v149 = vunpack.c.l.b16 %v63
    %v150 = vunpack.c.l.b16 %v64
    %v151 = vunpack.c.l.b16 %v65
    %v152 = vpack.c.b16 %v149, %v148
    %v153 = vpack.c.b16 %v151, %v150
    %vm156 = vcmask 261120
    %v158 = vsel %vm156, %v58, 0
    %v161 = vsel %vm156, %v59, 0
    %v164 = vsel %vm156, %v60, 0
    %v167 = vsel %vm156, %v61, 0
    %169 = vmatpush.bf16.msra.mxu0 0
    %170 = vmatpush.bf16.msra.mxu0 0
    %171 = vmatpush.bf16.msra.mxu0 0
    %172 = vmatpush.bf16.msra.mxu0 0
    %173 = vmatpush.bf16.msra.mxu0 0
    %174 = vmatpush.bf16.msra.mxu0 0
    %175 = vmatpush.bf16.msra.mxu0 %v153
    %176 = vmatpush.bf16.msra.mxu0 %v152
    %177 = vmatmul.bf16.gmra.mxu0 %v158
    %v178 = vpop.f32.mrf.mxu0
    %v179 = vadd.f32 %v125, %v178
    %v180 = vpop.f32.mrf.mxu0
    %v181 = vadd.f32 %v127, %v180
    %182 = vmatmul.bf16.gmra.mxu0 %v161
    %v183 = vpop.f32.mrf.mxu0
    %v184 = vadd.f32 %v130, %v183
    %v185 = vpop.f32.mrf.mxu0
    %v186 = vadd.f32 %v132, %v185
    %187 = vmatmul.bf16.gmra.mxu0 %v164
    %v188 = vpop.f32.mrf.mxu0
    %v189 = vadd.f32 %v135, %v188
    %v190 = vpop.f32.mrf.mxu0
    %v191 = vadd.f32 %v137, %v190
    %192 = vmatmul.bf16.gmra.mxu0 %v167
    %v193 = vpop.f32.mrf.mxu0
    %v194 = vadd.f32 %v140, %v193
    %v195 = vpop.f32.mrf.mxu0
    %v196 = vadd.f32 %v142, %v195
    %197 = vdwg.mxu0
    %v198 = vld [vmem:[%s2] sm:$0xff]
    %v199 = vld [vmem:[%s2 + $0x8] sm:$0xff]
    %v200 = vld [vmem:[%s2 + $0x10] sm:$0xff]
    %v201 = vld [vmem:[%s2 + $0x18] sm:$0xff]
    %v202 = vld [vmem:[%s2 + $0x20] sm:$0xff]
    %v203 = vld [vmem:[%s2 + $0x28] sm:$0xff]
    %v204 = vld [vmem:[%s2 + $0x30] sm:$0xff]
    %v205 = vld [vmem:[%s2 + $0x38] sm:$0xff]
    %v206 = vpack.c.bf16 %v199, %v198
    %v207 = vpack.c.bf16 %v201, %v200
    %v208 = vpack.c.bf16 %v203, %v202
    %v209 = vpack.c.bf16 %v205, %v204
    %v210 = vld [vmem:[%s5] sm:$0xf]
    %v211 = vld [vmem:[%s5 + $0x4] sm:$0xf]
    %v212 = vld [vmem:[%s5 + $0x8] sm:$0xf]
    %v213 = vld [vmem:[%s5 + $0xc] sm:$0xf]
    %v214 = vld [vmem:[%s5 + $0x10] sm:$0xf]
    %v215 = vld [vmem:[%s5 + $0x14] sm:$0xf]
    %v222 = vunpack.c.l.b16 %v210
    %v223 = vunpack.c.l.b16 %v211
    %v224 = vunpack.c.l.b16 %v212
    %v225 = vunpack.c.l.b16 %v213
    %v226 = vunpack.c.l.b16 %v214
    %v227 = vunpack.c.l.b16 %v215
    %v228 = vpack.c.b16 %v223, %v222
    %v229 = vpack.c.b16 %v225, %v224
    %v230 = vpack.c.b16 %v227, %v226
    %v235 = vsel %vm102, %v206, 0
    %v238 = vsel %vm102, %v207, 0
    %v241 = vsel %vm102, %v208, 0
    %v244 = vsel %vm102, %v209, 0
    %246 = vmatpush.bf16.msra.mxu0 0
    %247 = vmatpush.bf16.msra.mxu0 0
    %248 = vmatpush.bf16.msra.mxu0 0
    %249 = vmatpush.bf16.msra.mxu0 0
    %250 = vmatpush.bf16.msra.mxu0 0
    %251 = vmatpush.bf16.msra.mxu0 %v230
    %252 = vmatpush.bf16.msra.mxu0 %v229
    %253 = vmatpush.bf16.msra.mxu0 %v228
    %254 = vmatmul.bf16.gmra.mxu0 %v235
    %v255 = vpop.f32.mrf.mxu0
    %v256 = vadd.f32 0.0, %v255
    %v257 = vpop.f32.mrf.mxu0
    %v258 = vadd.f32 0.0, %v257
    %259 = vmatmul.bf16.gmra.mxu0 %v238
    %v260 = vpop.f32.mrf.mxu0
    %v261 = vadd.f32 0.0, %v260
    %v262 = vpop.f32.mrf.mxu0
    %v263 = vadd.f32 0.0, %v262
    %264 = vmatmul.bf16.gmra.mxu0 %v241
    %v265 = vpop.f32.mrf.mxu0
    %v266 = vadd.f32 0.0, %v265
    %v267 = vpop.f32.mrf.mxu0
    %v268 = vadd.f32 0.0, %v267
    %269 = vmatmul.bf16.gmra.mxu0 %v244
    %v270 = vpop.f32.mrf.mxu0
    %v271 = vadd.f32 0.0, %v270
    %v272 = vpop.f32.mrf.mxu0
    %v273 = vadd.f32 0.0, %v272
    %274 = vdwg.mxu0
    %v275 = vadd.f32 %v179, %v256
    %v276 = vadd.f32 %v181, %v258
    %v277 = vadd.f32 %v184, %v261
    %v278 = vadd.f32 %v186, %v263
    %v279 = vadd.f32 %v189, %v266
    %v280 = vadd.f32 %v191, %v268
    %v281 = vadd.f32 %v194, %v271
    %v282 = vadd.f32 %v196, %v273
    %v283 = vld [vmem:[%s6] sm:$0x1]
    %v285 = vperm.slane %v283, 0
    %v287 = vadd.f32 %v275, %v285
    %v288 = vadd.f32 %v276, %v285
    %v289 = vadd.f32 %v277, %v285
    %v290 = vadd.f32 %v278, %v285
    %v291 = vadd.f32 %v279, %v285
    %v292 = vadd.f32 %v280, %v285
    %v293 = vadd.f32 %v281, %v285
    %v294 = vadd.f32 %v282, %v285
    %v295 = vmax.f32 %v287, 0.0
    %v296 = vmax.f32 %v288, 0.0
    %v297 = vmax.f32 %v289, 0.0
    %v298 = vmax.f32 %v290, 0.0
    %v299 = vmax.f32 %v291, 0.0
    %v300 = vmax.f32 %v292, 0.0
    %v301 = vmax.f32 %v293, 0.0
    %v302 = vmax.f32 %v294, 0.0
    %v303 = vpack.c.bf16 %v296, %v295
    %v304 = vpack.c.bf16 %v298, %v297
    %v305 = vpack.c.bf16 %v300, %v299
    %v306 = vpack.c.bf16 %v302, %v301
    %v307 = vld [vmem:[%s7] sm:$0xf]
    %v308 = vld [vmem:[%s7 + $0x4] sm:$0xf]
    %v309 = vld [vmem:[%s7 + $0x8] sm:$0xf]
    %v310 = vld [vmem:[%s7 + $0xc] sm:$0xf]
    %v311 = vld [vmem:[%s7 + $0x10] sm:$0xf]
    %v312 = vld [vmem:[%s7 + $0x14] sm:$0xf]
    %v313 = vld [vmem:[%s7 + $0x18] sm:$0xf]
    %v314 = vld [vmem:[%s7 + $0x1c] sm:$0xf]
    %v315 = vld [vmem:[%s8] sm:$0x1]
    %v317 = vperm.slane %v315, 0
    %v327 = vunpack.c.l.b16 %v307
    %v328 = vunpack.c.l.b16 %v308
    %v329 = vunpack.c.l.b16 %v309
    %v330 = vunpack.c.l.b16 %v310
    %v331 = vunpack.c.l.b16 %v311
    %v332 = vunpack.c.l.b16 %v312
    %v333 = vunpack.c.l.b16 %v313
    %v334 = vunpack.c.l.b16 %v314
    %v335 = vpack.c.b16 %v328, %v327
    %v336 = vpack.c.b16 %v330, %v329
    %v337 = vpack.c.b16 %v332, %v331
    %v338 = vpack.c.b16 %v334, %v333
    %vm343 = vcmask 523264
    %v345 = vsel %vm343, %v303, 0
    %v348 = vsel %vm343, %v304, 0
    %v351 = vsel %vm343, %v305, 0
    %v354 = vsel %vm343, %v306, 0
    %356 = vmatpush.bf16.msra.mxu0 0
    %357 = vmatpush.bf16.msra.mxu0 0
    %358 = vmatpush.bf16.msra.mxu0 0
    %359 = vmatpush.bf16.msra.mxu0 0
    %360 = vmatpush.bf16.msra.mxu0 %v338
    %361 = vmatpush.bf16.msra.mxu0 %v337
    %362 = vmatpush.bf16.msra.mxu0 %v336
    %363 = vmatpush.bf16.msra.mxu0 %v335
    %364 = vmatmul.bf16.gmra.mxu0 %v345
    %v365 = vpop.f32.mrf.mxu0
    %v366 = vadd.f32 %v317, %v365
    %v367 = vpop.f32.mrf.mxu0
    %v368 = vadd.f32 %v317, %v367
    %369 = vmatmul.bf16.gmra.mxu0 %v348
    %v370 = vpop.f32.mrf.mxu0
    %v371 = vadd.f32 %v317, %v370
    %v372 = vpop.f32.mrf.mxu0
    %v373 = vadd.f32 %v317, %v372
    %374 = vmatmul.bf16.gmra.mxu0 %v351
    %v375 = vpop.f32.mrf.mxu0
    %v376 = vadd.f32 %v317, %v375
    %v377 = vpop.f32.mrf.mxu0
    %v378 = vadd.f32 %v317, %v377
    %379 = vmatmul.bf16.gmra.mxu0 %v354
    %v380 = vpop.f32.mrf.mxu0
    %v381 = vadd.f32 %v317, %v380
    %v382 = vpop.f32.mrf.mxu0
    %v383 = vadd.f32 %v317, %v382
    %384 = vdwg.mxu0
    %v385 = vmax.f32 %v366, 0.0
    %v386 = vmax.f32 %v368, 0.0
    %v387 = vmax.f32 %v371, 0.0
    %v388 = vmax.f32 %v373, 0.0
    %v389 = vmax.f32 %v376, 0.0
    %v390 = vmax.f32 %v378, 0.0
    %v391 = vmax.f32 %v381, 0.0
    %v392 = vmax.f32 %v383, 0.0
    %393 = vst.msk [vmem:[#allocation2] sm:$0xff] %vm156, %v50
    %394 = vst.msk [vmem:[#allocation2 + $0x8] sm:$0xff] %vm156, %v51
    %395 = vst.msk [vmem:[#allocation2 + $0x10] sm:$0xff] %vm156, %v52
    %396 = vst.msk [vmem:[#allocation2 + $0x18] sm:$0xff] %vm156, %v53
    %397 = vst.msk [vmem:[#allocation2 + $0x20] sm:$0xff] %vm156, %v54
    %398 = vst.msk [vmem:[#allocation2 + $0x28] sm:$0xff] %vm156, %v55
    %399 = vst.msk [vmem:[#allocation2 + $0x30] sm:$0xff] %vm156, %v56
    %400 = vst.msk [vmem:[#allocation2 + $0x38] sm:$0xff] %vm156, %v57
    %v401 = vld [vmem:[%s1] sm:$0xff]
    %v402 = vld [vmem:[%s1 + $0x8] sm:$0xff]
    %v403 = vld [vmem:[%s1 + $0x10] sm:$0xff]
    %v404 = vld [vmem:[%s1 + $0x18] sm:$0xff]
    %v405 = vld [vmem:[%s1 + $0x20] sm:$0xff]
    %v406 = vld [vmem:[%s1 + $0x28] sm:$0xff]
    %v407 = vld [vmem:[%s1 + $0x30] sm:$0xff]
    %v408 = vld [vmem:[%s1 + $0x38] sm:$0xff]
    %417 = vrot.lane.b32.xlu0 %v401, 32
    %v418 = vpop.permute.xlu0 %417
    %419 = vrot.lane.b32.xlu0 %v402, 32
    %v420 = vpop.permute.xlu0 %419
    %421 = vrot.lane.b32.xlu0 %v403, 32
    %v422 = vpop.permute.xlu0 %421
    %423 = vrot.lane.b32.xlu0 %v404, 32
    %v424 = vpop.permute.xlu0 %423
    %425 = vrot.lane.b32.xlu0 %v405, 32
    %v426 = vpop.permute.xlu0 %425
    %427 = vrot.lane.b32.xlu0 %v406, 32
    %v428 = vpop.permute.xlu0 %427
    %429 = vrot.lane.b32.xlu0 %v407, 32
    %v430 = vpop.permute.xlu0 %429
    %431 = vrot.lane.b32.xlu0 %v408, 32
    %v432 = vpop.permute.xlu0 %431
    %vm441 = vcmask 654592
    %442 = vst.msk [vmem:[#allocation2] sm:$0xff] %vm441, %v418
    %443 = vst.msk [vmem:[#allocation2 + $0x8] sm:$0xff] %vm441, %v420
    %444 = vst.msk [vmem:[#allocation2 + $0x10] sm:$0xff] %vm441, %v422
    %445 = vst.msk [vmem:[#allocation2 + $0x18] sm:$0xff] %vm441, %v424
    %446 = vst.msk [vmem:[#allocation2 + $0x20] sm:$0xff] %vm441, %v426
    %447 = vst.msk [vmem:[#allocation2 + $0x28] sm:$0xff] %vm441, %v428
    %448 = vst.msk [vmem:[#allocation2 + $0x30] sm:$0xff] %vm441, %v430
    %449 = vst.msk [vmem:[#allocation2 + $0x38] sm:$0xff] %vm441, %v432
    %v450 = vld [vmem:[%s2] sm:$0xff]
    %v451 = vld [vmem:[%s2 + $0x8] sm:$0xff]
    %v452 = vld [vmem:[%s2 + $0x10] sm:$0xff]
    %v453 = vld [vmem:[%s2 + $0x18] sm:$0xff]
    %v454 = vld [vmem:[%s2 + $0x20] sm:$0xff]
    %v455 = vld [vmem:[%s2 + $0x28] sm:$0xff]
    %v456 = vld [vmem:[%s2 + $0x30] sm:$0xff]
    %v457 = vld [vmem:[%s2 + $0x38] sm:$0xff]
    %466 = vrot.lane.b32.xlu0 %v450, 80
    %v467 = vpop.permute.xlu0 %466
    %468 = vrot.lane.b32.xlu0 %v451, 80
    %v469 = vpop.permute.xlu0 %468
    %470 = vrot.lane.b32.xlu0 %v452, 80
    %v471 = vpop.permute.xlu0 %470
    %472 = vrot.lane.b32.xlu0 %v453, 80
    %v473 = vpop.permute.xlu0 %472
    %474 = vrot.lane.b32.xlu0 %v454, 80
    %v475 = vpop.permute.xlu0 %474
    %476 = vrot.lane.b32.xlu0 %v455, 80
    %v477 = vpop.permute.xlu0 %476
    %478 = vrot.lane.b32.xlu0 %v456, 80
    %v479 = vpop.permute.xlu0 %478
    %480 = vrot.lane.b32.xlu0 %v457, 80
    %v481 = vpop.permute.xlu0 %480
    %vm490 = vcmask 1048192
    %491 = vst.msk [vmem:[#allocation2] sm:$0xff] %vm490, %v467
    %492 = vst.msk [vmem:[#allocation2 + $0x8] sm:$0xff] %vm490, %v469
    %493 = vst.msk [vmem:[#allocation2 + $0x10] sm:$0xff] %vm490, %v471
    %494 = vst.msk [vmem:[#allocation2 + $0x18] sm:$0xff] %vm490, %v473
    %495 = vst.msk [vmem:[#allocation2 + $0x20] sm:$0xff] %vm490, %v475
    %496 = vst.msk [vmem:[#allocation2 + $0x28] sm:$0xff] %vm490, %v477
    %497 = vst.msk [vmem:[#allocation2 + $0x30] sm:$0xff] %vm490, %v479
    %498 = vst.msk [vmem:[#allocation2 + $0x38] sm:$0xff] %vm490, %v481
    %499 = vst.msk [vmem:[#allocation4] sm:$0xff] %vm343, %v385
    %500 = vst.msk [vmem:[#allocation4 + $0x8] sm:$0xff] %vm343, %v386
    %501 = vst.msk [vmem:[#allocation4 + $0x10] sm:$0xff] %vm343, %v387
    %502 = vst.msk [vmem:[#allocation4 + $0x18] sm:$0xff] %vm343, %v388
    %503 = vst.msk [vmem:[#allocation4 + $0x20] sm:$0xff] %vm343, %v389
    %504 = vst.msk [vmem:[#allocation4 + $0x28] sm:$0xff] %vm343, %v390
    %505 = vst.msk [vmem:[#allocation4 + $0x30] sm:$0xff] %vm343, %v391
    %506 = vst.msk [vmem:[#allocation4 + $0x38] sm:$0xff] %vm343, %v392
    %v507 = vpack.c.bf16 %v386, %v385
    %v508 = vpack.c.bf16 %v388, %v387
    %v509 = vpack.c.bf16 %v390, %v389
    %v510 = vpack.c.bf16 %v392, %v391
    %v511 = vld [vmem:[%s9] sm:$0xf]
    %v512 = vld [vmem:[%s9 + $0x4] sm:$0xf]
    %v513 = vld [vmem:[%s9 + $0x8] sm:$0xf]
    %v514 = vld [vmem:[%s9 + $0xc] sm:$0xf]
    %v515 = vld [vmem:[%s9 + $0x10] sm:$0xf]
    %v516 = vld [vmem:[%s9 + $0x14] sm:$0xf]
    %v517 = vld [vmem:[%s9 + $0x18] sm:$0xf]
    %v518 = vld [vmem:[%s9 + $0x1c] sm:$0xf]
    %v519 = vld [vmem:[%s10] sm:$0x1]
    %v521 = vperm.slane %v519, 0
    %v531 = vunpack.c.l.b16 %v511
    %v532 = vunpack.c.l.b16 %v512
    %v533 = vunpack.c.l.b16 %v513
    %v534 = vunpack.c.l.b16 %v514
    %v535 = vunpack.c.l.b16 %v515
    %v536 = vunpack.c.l.b16 %v516
    %v537 = vunpack.c.l.b16 %v517
    %v538 = vunpack.c.l.b16 %v518
    %v539 = vpack.c.b16 %v532, %v531
    %v540 = vpack.c.b16 %v534, %v533
    %v541 = vpack.c.b16 %v536, %v535
    %v542 = vpack.c.b16 %v538, %v537
    %v548 = vsel %vm343, %v507, 0
    %v551 = vsel %vm343, %v508, 0
    %v554 = vsel %vm343, %v509, 0
    %v557 = vsel %vm343, %v510, 0
    %559 = vmatpush.bf16.msra.mxu0 0
    %560 = vmatpush.bf16.msra.mxu0 0
    %561 = vmatpush.bf16.msra.mxu0 0
    %562 = vmatpush.bf16.msra.mxu0 0
    %563 = vmatpush.bf16.msra.mxu0 %v542
    %564 = vmatpush.bf16.msra.mxu0 %v541
    %565 = vmatpush.bf16.msra.mxu0 %v540
    %566 = vmatpush.bf16.msra.mxu0 %v539
    %567 = vmatmul.bf16.gmra.mxu0 %v548
    %v568 = vpop.f32.mrf.mxu0
    %v569 = vadd.f32 %v521, %v568
    %v570 = vpop.f32.mrf.mxu0
    %v571 = vadd.f32 %v521, %v570
    %572 = vmatmul.bf16.gmra.mxu0 %v551
    %v573 = vpop.f32.mrf.mxu0
    %v574 = vadd.f32 %v521, %v573
    %v575 = vpop.f32.mrf.mxu0
    %v576 = vadd.f32 %v521, %v575
    %577 = vmatmul.bf16.gmra.mxu0 %v554
    %v578 = vpop.f32.mrf.mxu0
    %v579 = vadd.f32 %v521, %v578
    %v580 = vpop.f32.mrf.mxu0
    %v581 = vadd.f32 %v521, %v580
    %582 = vmatmul.bf16.gmra.mxu0 %v557
    %v583 = vpop.f32.mrf.mxu0
    %v584 = vadd.f32 %v521, %v583
    %v585 = vpop.f32.mrf.mxu0
    %v586 = vadd.f32 %v521, %v585
    %587 = vdwg.mxu0
    %v588 = vmax.f32 %v569, 0.0
    %v589 = vmax.f32 %v571, 0.0
    %v590 = vmax.f32 %v574, 0.0
    %v591 = vmax.f32 %v576, 0.0
    %v592 = vmax.f32 %v579, 0.0
    %v593 = vmax.f32 %v581, 0.0
    %v594 = vmax.f32 %v584, 0.0
    %v595 = vmax.f32 %v586, 0.0
    %v596 = vpack.c.bf16 %v589, %v588
    %v597 = vpack.c.bf16 %v591, %v590
    %v598 = vpack.c.bf16 %v593, %v592
    %v599 = vpack.c.bf16 %v595, %v594
    %v600 = vld [vmem:[%s11] sm:$0xf]
    %v601 = vld [vmem:[%s11 + $0x4] sm:$0xf]
    %v602 = vld [vmem:[%s11 + $0x8] sm:$0xf]
    %v603 = vld [vmem:[%s11 + $0xc] sm:$0xf]
    %v604 = vld [vmem:[%s12] sm:$0x1]
    %v606 = vperm.slane %v604, 0
    %v612 = vunpack.c.l.b16 %v600
    %v613 = vunpack.c.l.b16 %v601
    %v614 = vunpack.c.l.b16 %v602
    %v615 = vunpack.c.l.b16 %v603
    %v616 = vpack.c.b16 %v613, %v612
    %v617 = vpack.c.b16 %v615, %v614
    %v621 = vsel %vm156, %v596, 0
    %v624 = vsel %vm156, %v597, 0
    %v627 = vsel %vm156, %v598, 0
    %v630 = vsel %vm156, %v599, 0
    %632 = vmatpush.bf16.msra.mxu0 0
    %633 = vmatpush.bf16.msra.mxu0 0
    %634 = vmatpush.bf16.msra.mxu0 0
    %635 = vmatpush.bf16.msra.mxu0 0
    %636 = vmatpush.bf16.msra.mxu0 0
    %637 = vmatpush.bf16.msra.mxu0 0
    %638 = vmatpush.bf16.msra.mxu0 %v617
    %639 = vmatpush.bf16.msra.mxu0 %v616
    %640 = vmatmul.bf16.gmra.mxu0 %v621
    %v641 = vpop.f32.mrf.mxu0
    %v642 = vadd.f32 %v606, %v641
    %v643 = vpop.f32.mrf.mxu0
    %v644 = vadd.f32 %v606, %v643
    %645 = vmatmul.bf16.gmra.mxu0 %v624
    %v646 = vpop.f32.mrf.mxu0
    %v647 = vadd.f32 %v606, %v646
    %v648 = vpop.f32.mrf.mxu0
    %v649 = vadd.f32 %v606, %v648
    %650 = vmatmul.bf16.gmra.mxu0 %v627
    %v651 = vpop.f32.mrf.mxu0
    %v652 = vadd.f32 %v606, %v651
    %v653 = vpop.f32.mrf.mxu0
    %v654 = vadd.f32 %v606, %v653
    %655 = vmatmul.bf16.gmra.mxu0 %v630
    %v656 = vpop.f32.mrf.mxu0
    %v657 = vadd.f32 %v606, %v656
    %v658 = vpop.f32.mrf.mxu0
    %v659 = vadd.f32 %v606, %v658
    %660 = vdwg.mxu0
    %vm661 = vcmask 130048
    %662 = vst.msk [vmem:[%s15] sm:$0xff] %vm661, %v642
    %663 = vst.msk [vmem:[%s15 + $0x8] sm:$0xff] %vm661, %v644
    %664 = vst.msk [vmem:[%s15 + $0x10] sm:$0xff] %vm661, %v647
    %665 = vst.msk [vmem:[%s15 + $0x18] sm:$0xff] %vm661, %v649
    %666 = vst.msk [vmem:[%s15 + $0x20] sm:$0xff] %vm661, %v652
    %667 = vst.msk [vmem:[%s15 + $0x28] sm:$0xff] %vm661, %v654
    %668 = vst.msk [vmem:[%s15 + $0x30] sm:$0xff] %vm661, %v657
    %669 = vst.msk [vmem:[%s15 + $0x38] sm:$0xff] %vm661, %v659
    // Predicated region
    $region54: #{tpu_custom_call.1} parent=1 // pred_check
      _
    $region55: #{tpu_custom_call.1} parent=1 // pred_check_branch
      %671 = sbr.rel (0) target = $region57
    $region56: #{tpu_custom_call.1} parent=1 // pred_region
      %673 = vsyncadd [#allocation3], 0
      %s674 = sshll.u32 [#allocation2], 4
      %s675 = int_to_ptr.vmem [resolvable:$true] %s674
      %s676 = sshll.u32 %s13, 4
      %s677 = int_to_ptr.hbm [resolvable:$true] %s676
      %682 = dma.vmem_to_hbm [thread:$0]  %s675, 1024, %s677, [#allocation3], 128, 128, 8
    $region57: #{tpu_custom_call.1} parent=1 // pred_fallthru
      _
    // Predicated region
    $region58: #{tpu_custom_call.1} parent=1 // pred_check
      _
    $region59: #{tpu_custom_call.1} parent=1 // pred_check_branch
      %684 = sbr.rel (0) target = $region61
    $region60: #{tpu_custom_call.1} parent=1 // pred_region
      %686 = vsyncadd [#allocation5], 0
      %s687 = sshll.u32 [#allocation4], 4
      %s688 = int_to_ptr.vmem [resolvable:$true] %s687
      %s689 = sshll.u32 %s14, 4
      %s690 = int_to_ptr.hbm [resolvable:$true] %s689
      %695 = dma.vmem_to_hbm [thread:$0]  %s688, 1024, %s690, [#allocation5], 128, 128, 8
    $region61: #{tpu_custom_call.1} parent=1 // pred_fallthru
      _
    // Predicated region
    $region62: #{tpu_custom_call.1} parent=1 // pred_check
      _
    $region63: #{tpu_custom_call.1} parent=1 // pred_check_branch
      %697 = sbr.rel (0) target = $region65
    $region64: #{tpu_custom_call.1} parent=1 // pred_region
      _
    $region65: #{tpu_custom_call.1} parent=1 // pred_fallthru
      _
    // Predicated region
    $region66: #{tpu_custom_call.1} parent=1 // pred_check
      _
    $region67: #{tpu_custom_call.1} parent=1 // pred_check_branch
      %699 = sbr.rel (0) target = $region69
    $region68: #{tpu_custom_call.1} parent=1 // pred_region
      %701 = dma.done [#allocation3], 1024
    $region69: #{tpu_custom_call.1} parent=1 // pred_fallthru
      _
    // Predicated region
    $region70: #{tpu_custom_call.1} parent=1 // pred_check
      _
    $region71: #{tpu_custom_call.1} parent=1 // pred_check_branch
      %703 = sbr.rel (0) target = $region73
    $region72: #{tpu_custom_call.1} parent=1 // pred_region
      %705 = dma.done [#allocation5], 1024
    $region73: #{tpu_custom_call.1} parent=1 // pred_fallthru
      _
    // Predicated region
    $region74: #{tpu_custom_call.1} parent=1 // pred_check
      _
    $region75: #{tpu_custom_call.1} parent=1 // pred_check_branch
      %707 = sbr.rel (0) target = $region77
    $region76: #{tpu_custom_call.1} parent=1 // pred_region
      _
    $region77: #{tpu_custom_call.1} parent=1 // pred_fallthru
      _
    %708 = vsyncpa [#allocation3], 1
    %709 = vsyncpa [#allocation5], 1

</llo_original>
